<compile_context>
chip_gen: v7x
topology: tpu7x:2x2x1
jax: 0.10.0
libtpu: 0.0.40
codegen_flags: <defaults>
</compile_context>

<pallas_src>
import functools
import math

import jax
import jax.numpy as jnp
from jax import lax
from jax.experimental import pallas as pl
from jax.experimental.pallas import tpu as pltpu


def _round_up(v, m):
    return (v + m - 1) // m * m


# -----------------------------------------------------------------------------
# Kernel 1: hoisted batched input projection  XP = X @ W_ih^T + (b_ih + b_hh)
# -----------------------------------------------------------------------------
def _input_proj_kernel(x_ref, wih_ref, b_ref, xp_ref):
    xp_ref[...] = (
        jnp.dot(x_ref[...], wih_ref[...], preferred_element_type=jnp.float32)
        + b_ref[...]
    )


# -----------------------------------------------------------------------------
# Kernel 2: the recurrence.  Only the small h @ W_hh^T matmul stays serial.
# -----------------------------------------------------------------------------
def _lstm_recurrent_kernel(xp_ref, whh_ref, h0_ref, c0_ref,
                           out_ref, hT_ref, cT_ref,
                           h_sc, c_sc,
                           *, t_total, t_chunk, needs_mask):
    t_blk = pl.program_id(1)
    hp = h_sc.shape[1]

    @pl.when(t_blk == 0)
    def _():
        h_sc[...] = h0_ref[...]
        c_sc[...] = c0_ref[...]

    whh = whh_ref[...]  # hoist the weight load out of the unrolled loop

    def step(i, carry):
        h, c = carry
        # Recurrent projection: bf16 MXU inputs, f32 accumulation.
        gates = xp_ref[i] + jnp.dot(h.astype(whh.dtype), whh,
                                    preferred_element_type=jnp.float32)
        i_g = jax.nn.sigmoid(gates[:, 0 * hp:1 * hp])
        f_g = jax.nn.sigmoid(gates[:, 1 * hp:2 * hp])
        g_g = jnp.tanh(gates[:, 2 * hp:3 * hp])
        o_g = jax.nn.sigmoid(gates[:, 3 * hp:4 * hp])
        c_new = f_g * c + i_g * g_g
        h_new = o_g * jnp.tanh(c_new)
        if needs_mask:  # static branch: freeze carries on padded timesteps
            valid = (t_blk * t_chunk + i) < t_total
            h_new = jnp.where(valid, h_new, h)
            c_new = jnp.where(valid, c_new, c)
        out_ref[i] = h_new.astype(out_ref.dtype)
        return h_new, c_new

    h_fin, c_fin = lax.fori_loop(0, t_chunk, step,
                                 (h_sc[...], c_sc[...]), unroll=True)
    h_sc[...] = h_fin
    c_sc[...] = c_fin

    # Final states written exactly once, on the last time chunk.
    @pl.when(t_blk == pl.num_programs(1) - 1)
    def _():
        hT_ref[...] = h_fin.astype(hT_ref.dtype)
        cT_ref[...] = c_fin.astype(cT_ref.dtype)


# -----------------------------------------------------------------------------
# Host-side wrapper: padding, weight layout, and the two pallas_calls.
# -----------------------------------------------------------------------------
def _prep_gate_matrix(w, hp, compute_dtype):
    """PyTorch (4H, K) gate matrix -> (K, 4*hp) transposed, per-gate padded."""
    four_h, k = w.shape
    h = four_h // 4
    w4 = w.reshape(4, h, k)
    w4 = jnp.pad(w4, ((0, 0), (0, hp - h), (0, 0)))
    return jnp.transpose(w4, (2, 0, 1)).reshape(k, 4 * hp).astype(compute_dtype)


def lstm_layer(x, w_ih, w_hh, b_ih, b_hh, h0, c0, *,
               t_chunk=8, compute_dtype=jnp.bfloat16):
    """x: (T, B, D) f32.  Returns (outputs (T, B, H), (h_T (B, H), c_T (B, H)))."""
    T, B, D = x.shape
    H = h0.shape[1]

    hp = _round_up(H, 128)            # lane-dense hidden size
    bp = _round_up(B, 8)              # sublane-aligned batch
    tc = max(1, min(t_chunk, T))      # timesteps per grid step
    tp = _round_up(T, tc)
    nt = tp // tc
    # Two batch shards when possible so the "parallel" axis can use both
    # TensorCores (v7x megacore); otherwise a single shard.
    b_blk = bp // 2 if (bp % 16 == 0) else bp
    nb = bp // b_blk

    # ---- one-off parameter / input preparation (plain XLA) ----
    wih_t = _prep_gate_matrix(w_ih, hp, compute_dtype)              # (D, 4hp)
    whh_t = _prep_gate_matrix(w_hh, hp, compute_dtype)              # (H, 4hp)
    whh_t = jnp.pad(whh_t, ((0, hp - H), (0, 0)))                   # (hp, 4hp)
    bias = jnp.pad((b_ih + b_hh).reshape(4, H).astype(jnp.float32),
                   ((0, 0), (0, hp - H))).reshape(1, 4 * hp)

    x_p = jnp.pad(x, ((0, tp - T), (0, bp - B), (0, 0)))
    x_flat = x_p.reshape(tp * bp, D).astype(compute_dtype)
    h0_p = jnp.pad(h0, ((0, bp - B), (0, hp - H))).astype(jnp.float32)
    c0_p = jnp.pad(c0, ((0, bp - B), (0, hp - H))).astype(jnp.float32)

    # ---- kernel 1: hoisted input projection (parallel over row blocks) ----
    rows_per_blk = tc * bp
    xp = pl.pallas_call(
        _input_proj_kernel,
        out_shape=jax.ShapeDtypeStruct((tp * bp, 4 * hp), jnp.float32),
        grid_spec=pltpu.PrefetchScalarGridSpec(
            num_scalar_prefetch=0,
            grid=(nt,),
            in_specs=[
                pl.BlockSpec((rows_per_blk, D), lambda i: (i, 0)),
                pl.BlockSpec((D, 4 * hp), lambda i: (0, 0)),
                pl.BlockSpec((1, 4 * hp), lambda i: (0, 0)),
            ],
            out_specs=pl.BlockSpec((rows_per_blk, 4 * hp), lambda i: (i, 0)),
        ),
        compiler_params=pltpu.CompilerParams(
            dimension_semantics=("parallel",)),
    )(x_flat, wih_t, bias)
    xp = xp.reshape(tp, bp, 4 * hp)

    # ---- kernel 2: sequential recurrence over time chunks ----
    kernel = functools.partial(_lstm_recurrent_kernel,
                               t_total=T, t_chunk=tc, needs_mask=(tp != T))
    outs, h_T, c_T = pl.pallas_call(
        kernel,
        out_shape=(
            jax.ShapeDtypeStruct((tp, bp, hp), jnp.float32),
            jax.ShapeDtypeStruct((bp, hp), jnp.float32),
            jax.ShapeDtypeStruct((bp, hp), jnp.float32),
        ),
        grid_spec=pltpu.PrefetchScalarGridSpec(
            num_scalar_prefetch=0,
            grid=(nb, nt),
            in_specs=[
                pl.BlockSpec((tc, b_blk, 4 * hp), lambda b, t: (t, b, 0)),  # xp
                pl.BlockSpec((hp, 4 * hp), lambda b, t: (0, 0)),            # W_hh^T
                pl.BlockSpec((b_blk, hp), lambda b, t: (b, 0)),             # h0
                pl.BlockSpec((b_blk, hp), lambda b, t: (b, 0)),             # c0
            ],
            out_specs=[
                pl.BlockSpec((tc, b_blk, hp), lambda b, t: (t, b, 0)),      # outputs
                pl.BlockSpec((b_blk, hp), lambda b, t: (b, 0)),             # h_T
                pl.BlockSpec((b_blk, hp), lambda b, t: (b, 0)),             # c_T
            ],
            scratch_shapes=[
                pltpu.VMEM((b_blk, hp), jnp.float32),   # h carry
                pltpu.VMEM((b_blk, hp), jnp.float32),   # c carry
            ],
        ),
        compiler_params=pltpu.CompilerParams(
            dimension_semantics=("parallel", "arbitrary")),  # T stays sequential
    )(xp, whh_t, h0_p, c0_p)

    outputs = outs[:T, :B, :H]
    return outputs, (h_T[:B, :H], c_T[:B, :H])


# -----------------------------------------------------------------------------
# References for correctness checking.
# -----------------------------------------------------------------------------
def _reference_f32(x, w_ih, w_hh, b_ih, b_hh, h0, c0):
    """Pure f32 LSTMCell loop (module semantics)."""
    H = h0.shape[1]

    def step(carry, x_t):
        h, c = carry
        gates = x_t @ w_ih.T + b_ih + h @ w_hh.T + b_hh
        i = jax.nn.sigmoid(gates[:, 0:H])
        f = jax.nn.sigmoid(gates[:, H:2 * H])
        g = jnp.tanh(gates[:, 2 * H:3 * H])
        o = jax.nn.sigmoid(gates[:, 3 * H:4 * H])
        c_new = f * c + i * g
        h_new = o * jnp.tanh(c_new)
        return (h_new, c_new), h_new

    (h_T, c_T), outs = lax.scan(step, (h0, c0), x)
    return outs, (h_T, c_T)


def _reference_mixed(x, w_ih, w_hh, b_ih, b_hh, h0, c0, compute_dtype):
    """Mirrors the kernel numerics: bf16 matmul inputs, f32 accumulation/state."""
    H = h0.shape[1]
    wih_t = w_ih.T.astype(compute_dtype)
    whh_t = w_hh.T.astype(compute_dtype)
    bias = (b_ih + b_hh).astype(jnp.float32)
    xp = jnp.einsum('tbd,dg->tbg', x.astype(compute_dtype), wih_t,
                    preferred_element_type=jnp.float32) + bias

    def step(carry, xp_t):
        h, c = carry
        gates = xp_t + jnp.dot(h.astype(compute_dtype), whh_t,
                               preferred_element_type=jnp.float32)
        i = jax.nn.sigmoid(gates[:, 0:H])
        f = jax.nn.sigmoid(gates[:, H:2 * H])
        g = jnp.tanh(gates[:, 2 * H:3 * H])
        o = jax.nn.sigmoid(gates[:, 3 * H:4 * H])
        c_new = f * c + i * g
        h_new = o * jnp.tanh(c_new)
        return (h_new, c_new), h_new

    (h_T, c_T), outs = lax.scan(step, (h0, c0), xp)
    return outs, (h_T, c_T)


if __name__ == "__main__":
    # Small shapes consistent with the module's forward: inp is (seq, batch, inp_size).
    T, B, D, H = 8, 4, 16, 32

    key = jax.random.PRNGKey(0)
    kx, kwih, kwhh, kbih, kbhh, kh, kc = jax.random.split(key, 7)

    x = jax.random.normal(kx, (T, B, D), dtype=jnp.float32)

    # nn.LSTMCell default init: uniform(-1/sqrt(H), 1/sqrt(H)).
    bound = 1.0 / math.sqrt(H)
    w_ih = jax.random.uniform(kwih, (4 * H, D), minval=-bound, maxval=bound, dtype=jnp.float32)
    w_hh = jax.random.uniform(kwhh, (4 * H, H), minval=-bound, maxval=bound, dtype=jnp.float32)
    b_ih = jax.random.uniform(kbih, (4 * H,), minval=-bound, maxval=bound, dtype=jnp.float32)
    b_hh = jax.random.uniform(kbhh, (4 * H,), minval=-bound, maxval=bound, dtype=jnp.float32)

    # forward() does xavier_normal_ init of (batch, hid) states; done host-side here.
    xavier_std = math.sqrt(2.0 / (B + H))
    h0 = xavier_std * jax.random.normal(kh, (B, H), dtype=jnp.float32)
    c0 = xavier_std * jax.random.normal(kc, (B, H), dtype=jnp.float32)

    outputs, (h_T, c_T) = lstm_layer(x, w_ih, w_hh, b_ih, b_hh, h0, c0)
    jax.block_until_ready((outputs, h_T, c_T))

    # Check 1: tight, against a reference with the same mixed precision.
    ref_outs, (ref_h, ref_c) = _reference_mixed(x, w_ih, w_hh, b_ih, b_hh, h0, c0,
                                                jnp.bfloat16)
    assert jnp.allclose(outputs, ref_outs, atol=1e-3, rtol=1e-3)
    assert jnp.allclose(h_T, ref_h, atol=1e-3, rtol=1e-3)
    assert jnp.allclose(c_T, ref_c, atol=1e-3, rtol=1e-3)

    # Check 2: loose, against the pure-f32 module semantics (bf16 MXU inputs).
    f32_outs, (f32_h, f32_c) = _reference_f32(x, w_ih, w_hh, b_ih, b_hh, h0, c0)
    assert jnp.allclose(outputs, f32_outs, atol=5e-2, rtol=5e-2)
    assert jnp.allclose(h_T, f32_h, atol=5e-2, rtol=5e-2)
    assert jnp.allclose(c_T, f32_c, atol=5e-2, rtol=5e-2)

    print("KERNEL_OK")
</pallas_src>

<mosaic_0001>
module attributes {stable_mosaic.version = 11 : i64} {
  func.func @_input_proj_kernel(%arg0: i32, %arg1: memref<64x16xbf16, #tpu.memory_space<vmem>>, %arg2: memref<16x512xbf16, #tpu.memory_space<vmem>>, %arg3: memref<1x512xf32, #tpu.memory_space<vmem>>, %arg4: memref<64x512xf32, #tpu.memory_space<vmem>>) attributes {dimension_semantics = [#tpu.dimension_semantics<parallel>], iteration_bounds = array<i64: 1>, scalar_prefetch = 0 : i64, scratch_operands = 0 : i64, tpu.core_type = #tpu.core_type<tc>, window_params = [{transform_indices = @transform_0, window_bounds = array<i64: 64, 16>}, {pipeline_mode = #tpu.pipeline_mode<synchronous>, transform_indices = @transform_1, window_bounds = array<i64: 16, 512>}, {pipeline_mode = #tpu.pipeline_mode<synchronous>, transform_indices = @transform_2, window_bounds = array<i64: 1, 512>}, {transform_indices = @transform_3, window_bounds = array<i64: 64, 512>}]} {
    %c0 = arith.constant 0 : index
    %c0_0 = arith.constant 0 : index
    %0 = vector.load %arg1[%c0, %c0_0] : memref<64x16xbf16, #tpu.memory_space<vmem>>, vector<64x16xbf16>
    %c0_1 = arith.constant 0 : index
    %c0_2 = arith.constant 0 : index
    %1 = vector.load %arg2[%c0_1, %c0_2] : memref<16x512xbf16, #tpu.memory_space<vmem>>, vector<16x512xbf16>
    %cst = arith.constant dense<0.000000e+00> : vector<64x512xf32>
    %2 = tpu.matmul %0, %1, %cst {dimension_numbers = #tpu.dot_dimension_numbers<[1], [0], [0], [1], [0, 0, 1, 1], [], []>} : vector<64x16xbf16>, vector<16x512xbf16>, vector<64x512xf32> -> vector<64x512xf32>
    %c0_3 = arith.constant 0 : index
    %c0_4 = arith.constant 0 : index
    %3 = vector.load %arg3[%c0_3, %c0_4] : memref<1x512xf32, #tpu.memory_space<vmem>>, vector<1x512xf32>
    %4 = vector.broadcast %3 : vector<1x512xf32> to vector<64x512xf32>
    %5 = arith.addf %2, %4 : vector<64x512xf32>
    %c0_5 = arith.constant 0 : index
    %c0_6 = arith.constant 0 : index
    %6 = vector.load %arg4[%c0_5, %c0_6] : memref<64x512xf32, #tpu.memory_space<vmem>>, vector<64x512xf32>
    tpu.vector_store %arg4[%c0_5, %c0_6], %5 {strides = array<i32>} : memref<64x512xf32, #tpu.memory_space<vmem>>, vector<64x512xf32>,
    return
  }
  func.func @transform_0(%arg0: i32) -> (i32, i32) {
    %c0_i32 = arith.constant 0 : i32
    %c0_i32_0 = arith.constant 0 : i32
    return %arg0, %c0_i32 : i32, i32
  }
  func.func @transform_1(%arg0: i32) -> (i32, i32) {
    %c0_i32 = arith.constant 0 : i32
    %c0_i32_0 = arith.constant 0 : i32
    %c0_i32_1 = arith.constant 0 : i32
    return %c0_i32, %c0_i32_0 : i32, i32
  }
  func.func @transform_2(%arg0: i32) -> (i32, i32) {
    %c0_i32 = arith.constant 0 : i32
    %c0_i32_0 = arith.constant 0 : i32
    %c0_i32_1 = arith.constant 0 : i32
    return %c0_i32, %c0_i32_0 : i32, i32
  }
  func.func @transform_3(%arg0: i32) -> (i32, i32) {
    %c0_i32 = arith.constant 0 : i32
    %c0_i32_0 = arith.constant 0 : i32
    return %arg0, %c0_i32 : i32, i32
  }
}

</mosaic_0001>

<llo_original>
// kernel: tpu_custom_call.1
$region0: #{tpu_custom_call.1}
  #allocation0 [shape = 'u32[]', space=smem, size = 0x4, offset = 0x4, fixed_abs, tag = 'smem constant byte address 0x4 - core index']
  #allocation1 [shape = 'u32[144,128]{1,0:T(1,128)}', space=vmem, size = 0x12000, scoped, tag = 'internal scratch']
  %s0 = inlined_call_operand.vmem [shape: bf16[64,16], index: 0, kind: input, shape index: {}]
  %s1 = inlined_call_operand.vmem [shape: bf16[16,512], index: 1, kind: input, shape index: {}]
  %s2 = inlined_call_operand.vmem [shape: f32[1,512], index: 2, kind: input, shape index: {}]
  %s3 = inlined_call_operand.hbm [shape: f32[64,512], index: 3, kind: output, shape index: {}]
  %s4 = sld [smem:[#allocation0]]
  $region22: #{tpu_custom_call.1} parent=0
    _
  %s6 = ssub.s32 1, %s4
  %s7 = scalar_select 0, %s6, %s4
  $region1: #{tpu_custom_call.1} parent=0
    #allocation2 [shape = 'u8[131072]{0}', space=vmem, size = 0x20000, scoped, tag = 'output window, operand 0, single buffered']
    #allocation3 [shape = 's32[1]{0}', space=sflag, size = 0x4, scoped, tag = 'scoped memory for tpu_custom_call.1']
    %8 = vsyncpa [#allocation3], 0
    // Predicated region
    $region2: #{tpu_custom_call.1} parent=1 // pred_check
      _
    $region3: #{tpu_custom_call.1} parent=1 // pred_check_branch
      %10 = sbr.rel (0) target = $region5
    $region4: #{tpu_custom_call.1} parent=1 // pred_region
      _
    $region5: #{tpu_custom_call.1} parent=1 // pred_fallthru
      _
    // Predicated region
    $region6: #{tpu_custom_call.1} parent=1 // pred_check
      _
    $region7: #{tpu_custom_call.1} parent=1 // pred_check_branch
      %12 = sbr.rel (0) target = $region9
    $region8: #{tpu_custom_call.1} parent=1 // pred_region
      _
    $region9: #{tpu_custom_call.1} parent=1 // pred_fallthru
      _
    // Predicated region
    $region10: #{tpu_custom_call.1} parent=1 // pred_check
      _
    $region11: #{tpu_custom_call.1} parent=1 // pred_check_branch
      %14 = sbr.rel (0) target = $region13
    $region12: #{tpu_custom_call.1} parent=1 // pred_region
      _
    $region13: #{tpu_custom_call.1} parent=1 // pred_fallthru
      _
    %v16 = vld [vmem:[%s0] sm:$0xf]
    %v17 = vld [vmem:[%s0 + $0x4] sm:$0xf]
    %v18 = vld [vmem:[%s0 + $0x8] sm:$0xf]
    %v19 = vld [vmem:[%s0 + $0xc] sm:$0xf]
    %v20 = vld [vmem:[%s0 + $0x10] sm:$0xf]
    %v21 = vld [vmem:[%s0 + $0x14] sm:$0xf]
    %v22 = vld [vmem:[%s0 + $0x18] sm:$0xf]
    %v23 = vld [vmem:[%s0 + $0x1c] sm:$0xf]
    %v24 = vld [vmem:[%s1] sm:$0xff]
    %v25 = vld [vmem:[%s1 + $0x8] sm:$0xff]
    %v26 = vld [vmem:[%s1 + $0x10] sm:$0xff]
    %v27 = vld [vmem:[%s1 + $0x18] sm:$0xff]
    %v28 = vld [vmem:[%s2] sm:$0xf]
    %v30 = vlaneseq
    %v31 = vshrl.u32 %v30, 7
    %v32 = vsub.s32 0, %v31
    %v33 = vrot.slane %v28, %v32
    %v34 = vlaneseq
    %v35 = vshrl.u32 %v34, 7
    %v36 = vsub.s32 1, %v35
    %v37 = vrot.slane %v28, %v36
    %v38 = vlaneseq
    %v39 = vshrl.u32 %v38, 7
    %v40 = vsub.s32 2, %v39
    %v41 = vrot.slane %v28, %v40
    %v42 = vlaneseq
    %v43 = vshrl.u32 %v42, 7
    %v44 = vsub.s32 3, %v43
    %v45 = vrot.slane %v28, %v44
    %v58 = vunpack.c.l.b16 %v16
    %v59 = vunpack.c.l.b16 %v17
    %v60 = vunpack.c.l.b16 %v18
    %v61 = vunpack.c.l.b16 %v19
    %v62 = vunpack.c.l.b16 %v20
    %v63 = vunpack.c.l.b16 %v21
    %v64 = vunpack.c.l.b16 %v22
    %v65 = vunpack.c.l.b16 %v23
    %v66 = vpack.c.b16 %v59, %v58
    %v67 = vpack.c.b16 %v61, %v60
    %v68 = vpack.c.b16 %v63, %v62
    %v69 = vpack.c.b16 %v65, %v64
    %v74 = vunpack.c.l.b16 %v24
    %v75 = vunpack.c.h.b16 %v24
    %v76 = vunpack.c.l.b16 %v25
    %v77 = vunpack.c.h.b16 %v25
    %v78 = vunpack.c.l.b16 %v26
    %v79 = vunpack.c.h.b16 %v26
    %v80 = vunpack.c.l.b16 %v27
    %v81 = vunpack.c.h.b16 %v27
    %v82 = vpack.c.b16 %v78, %v74
    %v83 = vpack.c.b16 %v79, %v75
    %v84 = vpack.c.b16 %v80, %v76
    %v85 = vpack.c.b16 %v81, %v77
    %vm90 = vcmask 130048
    %v92 = vsel %vm90, %v66, 0
    %v95 = vsel %vm90, %v67, 0
    %v98 = vsel %vm90, %v68, 0
    %v101 = vsel %vm90, %v69, 0
    %103 = vmatprep.subr.bf16.mxu0 %v83
    %104 = vmatpush1.bf16.msra.mxu0 %v82
    %105 = vmatprep.subr.bf16.mxu0 0
    %106 = vmatpush1.bf16.msra.mxu0 0
    %107 = vmatprep.subr.bf16.mxu0 0
    %108 = vmatpush1.bf16.msra.mxu0 0
    %109 = vmatprep.subr.bf16.mxu0 0
    %110 = vmatpush1.bf16.msra.mxu0 0
    %111 = vmatprep.subr.bf16.mxu0 0
    %112 = vmatpush1.bf16.msra.mxu0 0
    %113 = vmatprep.subr.bf16.mxu0 0
    %114 = vmatpush1.bf16.msra.mxu0 0
    %115 = vmatprep.subr.bf16.mxu0 0
    %116 = vmatpush1.bf16.msra.mxu0 0
    %117 = vmatprep.subr.bf16.mxu0 0
    %118 = vmatpush1.bf16.msra.mxu0 0
    %119 = vmatprep.subr.bf16.mxu0 0
    %120 = vmatpush1.bf16.msra.mxu0 0
    %121 = vmatprep.subr.bf16.mxu0 0
    %122 = vmatpush1.bf16.msra.mxu0 0
    %123 = vmatprep.subr.bf16.mxu0 0
    %124 = vmatpush1.bf16.msra.mxu0 0
    %125 = vmatprep.subr.bf16.mxu0 0
    %126 = vmatpush1.bf16.msra.mxu0 0
    %127 = vmatprep.subr.bf16.mxu0 0
    %128 = vmatpush1.bf16.msra.mxu0 0
    %129 = vmatprep.subr.bf16.mxu0 0
    %130 = vmatpush1.bf16.msra.mxu0 0
    %131 = vmatprep.subr.bf16.mxu0 0
    %132 = vmatpush1.bf16.msra.mxu0 0
    %133 = vmatprep.subr.bf16.mxu0 0
    %134 = vmatpush1.bf16.msra.mxu0 0
    %135 = vmatprep.mubr.bf16.mxu0 0
    %136 = vmatmul.mubr.bf16.gmra.mrb[0].mxu0 %v92
    %v137 = vpop.f32.mrb[0].mxu0
    %v138 = vadd.f32 %v33, %v137
    %v139 = vpop.f32.mrb[0].mxu0
    %v140 = vadd.f32 %v37, %v139
    %v141 = vpop.f32.mrb[0].mxu0
    %v142 = vadd.f32 %v33, %v141
    %v143 = vpop.f32.mrb[0].mxu0
    %v144 = vadd.f32 %v37, %v143
    %145 = vmatprep.mubr.bf16.mxu0 0
    %146 = vmatmul.mubr.bf16.gmra.mrb[0].mxu0 %v95
    %v147 = vpop.f32.mrb[0].mxu0
    %v148 = vadd.f32 %v33, %v147
    %v149 = vpop.f32.mrb[0].mxu0
    %v150 = vadd.f32 %v37, %v149
    %v151 = vpop.f32.mrb[0].mxu0
    %v152 = vadd.f32 %v33, %v151
    %v153 = vpop.f32.mrb[0].mxu0
    %v154 = vadd.f32 %v37, %v153
    %155 = vmatprep.mubr.bf16.mxu0 0
    %156 = vmatmul.mubr.bf16.gmra.mrb[0].mxu0 %v98
    %v157 = vpop.f32.mrb[0].mxu0
    %v158 = vadd.f32 %v33, %v157
    %v159 = vpop.f32.mrb[0].mxu0
    %v160 = vadd.f32 %v37, %v159
    %v161 = vpop.f32.mrb[0].mxu0
    %v162 = vadd.f32 %v33, %v161
    %v163 = vpop.f32.mrb[0].mxu0
    %v164 = vadd.f32 %v37, %v163
    %165 = vmatprep.mubr.bf16.mxu0 0
    %166 = vmatmul.mubr.bf16.gmra.mrb[0].mxu0 %v101
    %v167 = vpop.f32.mrb[0].mxu0
    %v168 = vadd.f32 %v33, %v167
    %v169 = vpop.f32.mrb[0].mxu0
    %v170 = vadd.f32 %v37, %v169
    %v171 = vpop.f32.mrb[0].mxu0
    %v172 = vadd.f32 %v33, %v171
    %v173 = vpop.f32.mrb[0].mxu0
    %v174 = vadd.f32 %v37, %v173
    %175 = vdwg.mxu0
    %176 = vmatprep.subr.bf16.mxu0 %v85
    %177 = vmatpush1.bf16.msra.mxu0 %v84
    %178 = vmatprep.subr.bf16.mxu0 0
    %179 = vmatpush1.bf16.msra.mxu0 0
    %180 = vmatprep.subr.bf16.mxu0 0
    %181 = vmatpush1.bf16.msra.mxu0 0
    %182 = vmatprep.subr.bf16.mxu0 0
    %183 = vmatpush1.bf16.msra.mxu0 0
    %184 = vmatprep.subr.bf16.mxu0 0
    %185 = vmatpush1.bf16.msra.mxu0 0
    %186 = vmatprep.subr.bf16.mxu0 0
    %187 = vmatpush1.bf16.msra.mxu0 0
    %188 = vmatprep.subr.bf16.mxu0 0
    %189 = vmatpush1.bf16.msra.mxu0 0
    %190 = vmatprep.subr.bf16.mxu0 0
    %191 = vmatpush1.bf16.msra.mxu0 0
    %192 = vmatprep.subr.bf16.mxu0 0
    %193 = vmatpush1.bf16.msra.mxu0 0
    %194 = vmatprep.subr.bf16.mxu0 0
    %195 = vmatpush1.bf16.msra.mxu0 0
    %196 = vmatprep.subr.bf16.mxu0 0
    %197 = vmatpush1.bf16.msra.mxu0 0
    %198 = vmatprep.subr.bf16.mxu0 0
    %199 = vmatpush1.bf16.msra.mxu0 0
    %200 = vmatprep.subr.bf16.mxu0 0
    %201 = vmatpush1.bf16.msra.mxu0 0
    %202 = vmatprep.subr.bf16.mxu0 0
    %203 = vmatpush1.bf16.msra.mxu0 0
    %204 = vmatprep.subr.bf16.mxu0 0
    %205 = vmatpush1.bf16.msra.mxu0 0
    %206 = vmatprep.subr.bf16.mxu0 0
    %207 = vmatpush1.bf16.msra.mxu0 0
    %208 = vmatprep.mubr.bf16.mxu0 0
    %209 = vmatmul.mubr.bf16.gmra.mrb[0].mxu0 %v92
    %v210 = vpop.f32.mrb[0].mxu0
    %v211 = vadd.f32 %v41, %v210
    %v212 = vpop.f32.mrb[0].mxu0
    %v213 = vadd.f32 %v45, %v212
    %v214 = vpop.f32.mrb[0].mxu0
    %v215 = vadd.f32 %v41, %v214
    %v216 = vpop.f32.mrb[0].mxu0
    %v217 = vadd.f32 %v45, %v216
    %218 = vmatprep.mubr.bf16.mxu0 0
    %219 = vmatmul.mubr.bf16.gmra.mrb[0].mxu0 %v95
    %v220 = vpop.f32.mrb[0].mxu0
    %v221 = vadd.f32 %v41, %v220
    %v222 = vpop.f32.mrb[0].mxu0
    %v223 = vadd.f32 %v45, %v222
    %v224 = vpop.f32.mrb[0].mxu0
    %v225 = vadd.f32 %v41, %v224
    %v226 = vpop.f32.mrb[0].mxu0
    %v227 = vadd.f32 %v45, %v226
    %228 = vmatprep.mubr.bf16.mxu0 0
    %229 = vmatmul.mubr.bf16.gmra.mrb[0].mxu0 %v98
    %v230 = vpop.f32.mrb[0].mxu0
    %v231 = vadd.f32 %v41, %v230
    %v232 = vpop.f32.mrb[0].mxu0
    %v233 = vadd.f32 %v45, %v232
    %v234 = vpop.f32.mrb[0].mxu0
    %v235 = vadd.f32 %v41, %v234
    %v236 = vpop.f32.mrb[0].mxu0
    %v237 = vadd.f32 %v45, %v236
    %238 = vmatprep.mubr.bf16.mxu0 0
    %239 = vmatmul.mubr.bf16.gmra.mrb[0].mxu0 %v101
    %v240 = vpop.f32.mrb[0].mxu0
    %v241 = vadd.f32 %v41, %v240
    %v242 = vpop.f32.mrb[0].mxu0
    %v243 = vadd.f32 %v45, %v242
    %v244 = vpop.f32.mrb[0].mxu0
    %v245 = vadd.f32 %v41, %v244
    %v246 = vpop.f32.mrb[0].mxu0
    %v247 = vadd.f32 %v45, %v246
    %248 = vdwg.mxu0
    %249 = vst [vmem:[#allocation2] sm:$0xff] %v138
    %250 = vst [vmem:[#allocation2 + $0x8] sm:$0xff] %v140
    %251 = vst [vmem:[#allocation2 + $0x10] sm:$0xff] %v211
    %252 = vst [vmem:[#allocation2 + $0x18] sm:$0xff] %v213
    %253 = vst [vmem:[#allocation2 + $0x20] sm:$0xff] %v142
    %254 = vst [vmem:[#allocation2 + $0x28] sm:$0xff] %v144
    %255 = vst [vmem:[#allocation2 + $0x30] sm:$0xff] %v215
    %256 = vst [vmem:[#allocation2 + $0x38] sm:$0xff] %v217
    %257 = vst [vmem:[#allocation2 + $0x40] sm:$0xff] %v148
    %258 = vst [vmem:[#allocation2 + $0x48] sm:$0xff] %v150
    %259 = vst [vmem:[#allocation2 + $0x50] sm:$0xff] %v221
    %260 = vst [vmem:[#allocation2 + $0x58] sm:$0xff] %v223
    %261 = vst [vmem:[#allocation2 + $0x60] sm:$0xff] %v152
    %262 = vst [vmem:[#allocation2 + $0x68] sm:$0xff] %v154
    %263 = vst [vmem:[#allocation2 + $0x70] sm:$0xff] %v225
    %264 = vst [vmem:[#allocation2 + $0x78] sm:$0xff] %v227
    %265 = vst [vmem:[#allocation2 + $0x80] sm:$0xff] %v158
    %266 = vst [vmem:[#allocation2 + $0x88] sm:$0xff] %v160
    %267 = vst [vmem:[#allocation2 + $0x90] sm:$0xff] %v231
    %268 = vst [vmem:[#allocation2 + $0x98] sm:$0xff] %v233
    %269 = vst [vmem:[#allocation2 + $0xa0] sm:$0xff] %v162
    %270 = vst [vmem:[#allocation2 + $0xa8] sm:$0xff] %v164
    %271 = vst [vmem:[#allocation2 + $0xb0] sm:$0xff] %v235
    %272 = vst [vmem:[#allocation2 + $0xb8] sm:$0xff] %v237
    %273 = vst [vmem:[#allocation2 + $0xc0] sm:$0xff] %v168
    %274 = vst [vmem:[#allocation2 + $0xc8] sm:$0xff] %v170
    %275 = vst [vmem:[#allocation2 + $0xd0] sm:$0xff] %v241
    %276 = vst [vmem:[#allocation2 + $0xd8] sm:$0xff] %v243
    %277 = vst [vmem:[#allocation2 + $0xe0] sm:$0xff] %v172
    %278 = vst [vmem:[#allocation2 + $0xe8] sm:$0xff] %v174
    %279 = vst [vmem:[#allocation2 + $0xf0] sm:$0xff] %v245
    %280 = vst [vmem:[#allocation2 + $0xf8] sm:$0xff] %v247
    // Predicated region
    $region14: #{tpu_custom_call.1} parent=1 // pred_check
      _
    $region15: #{tpu_custom_call.1} parent=1 // pred_check_branch
      %282 = sbr.rel (0) target = $region17
    $region16: #{tpu_custom_call.1} parent=1 // pred_region
      %s284 = ssub.s32 4096, 4096
      %285 = vsyncadd [#allocation3], %s284
      %s286 = sshll.u32 [#allocation2], 4
      %s287 = int_to_ptr.vmem [resolvable:$true] %s286
      %292 = dma.vmem_to_hbm [thread:$0]  %s287, 4096, %s3, [#allocation3], 512, 512, 32
    $region17: #{tpu_custom_call.1} parent=1 // pred_fallthru
      _
    // Predicated region
    $region18: #{tpu_custom_call.1} parent=1 // pred_check
      _
    $region19: #{tpu_custom_call.1} parent=1 // pred_check_branch
      %294 = sbr.rel (0) target = $region21
    $region20: #{tpu_custom_call.1} parent=1 // pred_region
      %295 = dma.done [#allocation3], 4096
    $region21: #{tpu_custom_call.1} parent=1 // pred_fallthru
      _
    %296 = vsyncpa [#allocation3], 1

</llo_original>
